<compile_context>
chip_gen: v7x
topology: tpu7x:2x2x1
jax: 0.10.0
libtpu: 0.0.40
codegen_flags: <defaults>
</compile_context>

<pallas_src>
import functools

import jax
import jax.numpy as jnp
from jax.experimental import pallas as pl
from jax.experimental.pallas import tpu as pltpu


def _round_up(x, m):
    return (x + m - 1) // m * m


def rnn_seq_kernel(x_ref, h0_ref, wx_ref, wh_ref, bi_ref, wo_ref, bo_ref,
                   out_ref, hfin_ref, h_carry, *, out_valid):
    # x_ref   : (1, bB, Ip)  timestep-t slab of the input sequence
    # h0_ref  : (bB, Hp)     initial hidden state (read only at t == 0)
    # wx_ref  : (Ip, Hp)     i2h weight, input half   (pre-transposed, resident)
    # wh_ref  : (Hp, Hp)     i2h weight, hidden half  (pre-transposed, resident)
    # bi_ref  : (1, Hp)      i2h bias
    # wo_ref  : (Hp, Op)     h2o weight (pre-transposed, resident)
    # bo_ref  : (1, Op)      h2o bias
    # out_ref : (1, bB, Op)  per-timestep log-probs
    # hfin_ref: (bB, Hp)     final hidden state (written once at t == T-1)
    # h_carry : (bB, Hp) f32 VMEM-resident hidden carry (never hits HBM)
    t = pl.program_id(1)

    @pl.when(t == 0)
    def _():
        h_carry[...] = h0_ref[...].astype(jnp.float32)

    x = x_ref[0]
    h_prev = h_carry[...]

    # i2h as two MXU matmuls (no concat), f32 accumulation.
    hidden = (
        jnp.dot(x, wx_ref[...], preferred_element_type=jnp.float32)
        + jnp.dot(h_prev.astype(wh_ref.dtype), wh_ref[...],
                  preferred_element_type=jnp.float32)
        + bi_ref[...].astype(jnp.float32)
    )

    # h2o
    logits = (
        jnp.dot(hidden.astype(wo_ref.dtype), wo_ref[...],
                preferred_element_type=jnp.float32)
        + bo_ref[...].astype(jnp.float32)
    )

    # Mask padded output lanes so they don't participate in the softmax.
    if out_valid < logits.shape[1]:
        lane = jax.lax.broadcasted_iota(jnp.int32, logits.shape, 1)
        logits = jnp.where(lane < out_valid, logits, jnp.float32(-1e30))

    # Numerically stable LogSoftmax over dim=1 (all reductions in f32).
    m = jnp.max(logits, axis=1, keepdims=True)
    shifted = logits - m
    lse = jnp.log(jnp.sum(jnp.exp(shifted), axis=1, keepdims=True))

    out_ref[0] = (shifted - lse).astype(out_ref.dtype)
    h_carry[...] = hidden

    @pl.when(t == pl.num_programs(1) - 1)
    def _():
        hfin_ref[...] = hidden.astype(hfin_ref.dtype)


def rnn_sequence_forward(x_seq, h0, w_xh, w_hh, b_i2h, w_h2o, b_h2o,
                         *, block_b=128):
    """Run the char-RNN over a whole sequence in one fused Pallas kernel.

    x_seq : (T, B, I), h0 : (B, H)
    w_xh  : (I, H), w_hh : (H, H)   -> split of i2h weight (pre-transposed)
    b_i2h : (H,),  w_h2o : (H, O) (pre-transposed),  b_h2o : (O,)

    Returns (log_probs, h_final): log_probs (T, B, O) f32, h_final (B, H) f32.
    Per-step semantics identical to the PyTorch module's forward().
    """
    T, B, I = x_seq.shape
    H = w_hh.shape[0]
    O = w_h2o.shape[1]

    # Lane/sublane-dense padding.
    if B <= block_b:
        Bp = _round_up(B, 8)
        bB = Bp
    else:
        Bp = _round_up(B, block_b)
        bB = block_b
    Ip = _round_up(I, 128)
    Hp = _round_up(H, 128)
    Op = _round_up(O, 128)

    f32 = jnp.float32
    dt = w_xh.dtype  # parameter / MXU-input dtype (f32, or bf16 on v6e/v7x)

    xp = jnp.zeros((T, Bp, Ip), dt).at[:, :B, :I].set(x_seq.astype(dt))
    h0p = jnp.zeros((Bp, Hp), f32).at[:B, :H].set(h0.astype(f32))
    wxp = jnp.zeros((Ip, Hp), dt).at[:I, :H].set(w_xh)
    whp = jnp.zeros((Hp, Hp), dt).at[:H, :H].set(w_hh)
    bip = jnp.zeros((1, Hp), f32).at[0, :H].set(b_i2h.astype(f32))
    wop = jnp.zeros((Hp, Op), dt).at[:H, :O].set(w_h2o)
    bop = jnp.zeros((1, Op), f32).at[0, :O].set(b_h2o.astype(f32))

    nb = Bp // bB
    esz = jnp.dtype(dt).itemsize

    # Rough VMEM budget: resident weights + f32 carry/biases + double-buffered
    # x / out slabs.  Clamp to stay inside the v7x 64 MiB physical VMEM.
    vmem_bytes = (esz * (Ip * Hp + Hp * Hp + Hp * Op)
                  + 4 * (Hp + Op + 4 * bB * Hp)
                  + 2 * bB * (esz * Ip + 4 * Op))
    vmem_limit = int(min(max(2 * vmem_bytes, 4 << 20), 48 << 20))

    grid_spec = pltpu.PrefetchScalarGridSpec(
        num_scalar_prefetch=0,
        grid=(nb, T),
        in_specs=[
            pl.BlockSpec((1, bB, Ip), lambda b, t: (t, b, 0)),   # x_seq slab
            pl.BlockSpec((bB, Hp),    lambda b, t: (b, 0)),      # h0
            pl.BlockSpec((Ip, Hp),    lambda b, t: (0, 0)),      # Wx (resident)
            pl.BlockSpec((Hp, Hp),    lambda b, t: (0, 0)),      # Wh (resident)
            pl.BlockSpec((1, Hp),     lambda b, t: (0, 0)),      # b_i2h
            pl.BlockSpec((Hp, Op),    lambda b, t: (0, 0)),      # Wo (resident)
            pl.BlockSpec((1, Op),     lambda b, t: (0, 0)),      # b_h2o
        ],
        out_specs=(
            pl.BlockSpec((1, bB, Op), lambda b, t: (t, b, 0)),   # log-probs
            pl.BlockSpec((bB, Hp),    lambda b, t: (b, 0)),      # final hidden
        ),
        scratch_shapes=[pltpu.VMEM((bB, Hp), jnp.float32)],      # hidden carry
    )

    out_p, hfin_p = pl.pallas_call(
        functools.partial(rnn_seq_kernel, out_valid=O),
        out_shape=(
            jax.ShapeDtypeStruct((T, Bp, Op), jnp.float32),
            jax.ShapeDtypeStruct((Bp, Hp), jnp.float32),
        ),
        grid_spec=grid_spec,
        compiler_params=pltpu.CompilerParams(
            dimension_semantics=("parallel", "arbitrary"),
            vmem_limit_bytes=vmem_limit,
        ),
    )(xp, h0p, wxp, whp, bip, wop, bop)

    return out_p[:, :B, :O], hfin_p[:B, :H]


def rnn_forward(inp, hidden, w_xh, w_hh, b_i2h, w_h2o, b_h2o):
    """Single-timestep forward, identical to PyTorch RNN.forward(input, hidden)."""
    out_seq, h_new = rnn_sequence_forward(inp[None], hidden, w_xh, w_hh,
                                          b_i2h, w_h2o, b_h2o)
    return out_seq[0], h_new


def init_params(key, input_size, hidden_size, output_size, dtype=jnp.float32):
    """Mimics nn.Linear's U(-1/sqrt(fan_in), 1/sqrt(fan_in)); i2h split into Wx/Wh."""
    k1, k2, k3, k4 = jax.random.split(key, 4)
    fan_i2h = input_size + hidden_size
    bi = 1.0 / jnp.sqrt(fan_i2h)
    bo = 1.0 / jnp.sqrt(hidden_size)
    w_i2h_t = jax.random.uniform(k1, (fan_i2h, hidden_size), jnp.float32, -bi, bi)
    b_i2h = jax.random.uniform(k2, (hidden_size,), jnp.float32, -bi, bi)
    w_h2o_t = jax.random.uniform(k3, (hidden_size, output_size), jnp.float32, -bo, bo)
    b_h2o = jax.random.uniform(k4, (output_size,), jnp.float32, -bo, bo)
    # cat([x, h]) @ W_i2h  ==  x @ W_i2h[:I] + h @ W_i2h[I:]
    w_xh = w_i2h_t[:input_size].astype(dtype)
    w_hh = w_i2h_t[input_size:].astype(dtype)
    return w_xh, w_hh, b_i2h, w_h2o_t.astype(dtype), b_h2o


if __name__ == "__main__":
    B, T, INPUT, HIDDEN, OUTPUT = 2, 8, 16, 32, 8

    key = jax.random.PRNGKey(0)
    k_x, k_p = jax.random.split(key)

    x_seq = jax.random.normal(k_x, (T, B, INPUT), jnp.float32)
    h0 = jnp.zeros((B, HIDDEN), jnp.float32)   # initHidden() analogue (batched)

    w_xh, w_hh, b_i2h, w_h2o, b_h2o = init_params(k_p, INPUT, HIDDEN, OUTPUT)

    # Fused whole-sequence kernel.
    log_probs, h_final = jax.jit(rnn_sequence_forward)(
        x_seq, h0, w_xh, w_hh, b_i2h, w_h2o, b_h2o)
    jax.block_until_ready((log_probs, h_final))

    # Pure-JAX reference: exactly the PyTorch per-step recurrence.
    h_ref = h0
    outs_ref = []
    for t in range(T):
        hidden_ref = x_seq[t] @ w_xh + h_ref @ w_hh + b_i2h   # == cat @ W_i2h + b
        outs_ref.append(jax.nn.log_softmax(hidden_ref @ w_h2o + b_h2o, axis=1))
        h_ref = hidden_ref
    outs_ref = jnp.stack(outs_ref)

    assert jnp.allclose(h_final, h_ref, atol=1e-5), "final hidden mismatch"
    assert jnp.allclose(log_probs, outs_ref, atol=1e-5), "log_softmax mismatch"

    # Single-step wrapper matching RNN.forward(input, hidden) exactly.
    step_out, step_h = rnn_forward(x_seq[0], h0, w_xh, w_hh, b_i2h, w_h2o, b_h2o)
    jax.block_until_ready((step_out, step_h))
    assert jnp.allclose(step_out, outs_ref[0], atol=1e-5), "step output mismatch"
    assert jnp.allclose(step_h, x_seq[0] @ w_xh + h0 @ w_hh + b_i2h,
                        atol=1e-5), "step hidden mismatch"

    print("KERNEL_OK")
</pallas_src>

<mosaic_0001>
module attributes {stable_mosaic.version = 11 : i64} {
  func.func @rnn_seq_kernel(%arg0: i32, %arg1: i32, %arg2: memref<1x8x128xf32, #tpu.memory_space<vmem>>, %arg3: memref<8x128xf32, #tpu.memory_space<vmem>>, %arg4: memref<128x128xf32, #tpu.memory_space<vmem>>, %arg5: memref<128x128xf32, #tpu.memory_space<vmem>>, %arg6: memref<1x128xf32, #tpu.memory_space<vmem>>, %arg7: memref<128x128xf32, #tpu.memory_space<vmem>>, %arg8: memref<1x128xf32, #tpu.memory_space<vmem>>, %arg9: memref<1x8x128xf32, #tpu.memory_space<vmem>>, %arg10: memref<8x128xf32, #tpu.memory_space<vmem>>, %arg11: memref<8x128xf32, #tpu.memory_space<vmem>>) attributes {dimension_semantics = [#tpu.dimension_semantics<parallel>, #tpu.dimension_semantics<arbitrary>], iteration_bounds = array<i64: 1, 8>, scalar_prefetch = 0 : i64, scratch_operands = 1 : i64, tpu.core_type = #tpu.core_type<tc>, window_params = [{transform_indices = @transform_0, window_bounds = array<i64: 1, 8, 128>}, {transform_indices = @transform_1, window_bounds = array<i64: 8, 128>}, {pipeline_mode = #tpu.pipeline_mode<synchronous>, transform_indices = @transform_2, window_bounds = array<i64: 128, 128>}, {pipeline_mode = #tpu.pipeline_mode<synchronous>, transform_indices = @transform_3, window_bounds = array<i64: 128, 128>}, {pipeline_mode = #tpu.pipeline_mode<synchronous>, transform_indices = @transform_4, window_bounds = array<i64: 1, 128>}, {pipeline_mode = #tpu.pipeline_mode<synchronous>, transform_indices = @transform_5, window_bounds = array<i64: 128, 128>}, {pipeline_mode = #tpu.pipeline_mode<synchronous>, transform_indices = @transform_6, window_bounds = array<i64: 1, 128>}, {transform_indices = @transform_7, window_bounds = array<i64: 1, 8, 128>}, {transform_indices = @transform_8, window_bounds = array<i64: 8, 128>}]} {
    %c0_i32 = arith.constant 0 : i32
    %0 = arith.cmpi eq, %arg1, %c0_i32 : i32
    %1 = arith.extui %0 : i1 to i32
    %c0_i32_0 = arith.constant 0 : i32
    %2 = arith.cmpi ne, %1, %c0_i32_0 : i32
    scf.if %2 {
      %c0_26 = arith.constant 0 : index
      %c0_27 = arith.constant 0 : index
      %41 = vector.load %arg3[%c0_26, %c0_27] : memref<8x128xf32, #tpu.memory_space<vmem>>, vector<8x128xf32>
      %c0_28 = arith.constant 0 : index
      %c0_29 = arith.constant 0 : index
      %42 = vector.load %arg11[%c0_28, %c0_29] : memref<8x128xf32, #tpu.memory_space<vmem>>, vector<8x128xf32>
      tpu.vector_store %arg11[%c0_28, %c0_29], %41 {strides = array<i32>} : memref<8x128xf32, #tpu.memory_space<vmem>>, vector<8x128xf32>,
    } else {
    }
    %c0 = arith.constant 0 : index
    %c0_1 = arith.constant 0 : index
    %c0_2 = arith.constant 0 : index
    %3 = vector.load %arg2[%c0, %c0_1, %c0_2] : memref<1x8x128xf32, #tpu.memory_space<vmem>>, vector<1x8x128xf32>
    %4 = vector.shape_cast %3 : vector<1x8x128xf32> to vector<8x128xf32>
    %c0_3 = arith.constant 0 : index
    %c0_4 = arith.constant 0 : index
    %5 = vector.load %arg11[%c0_3, %c0_4] : memref<8x128xf32, #tpu.memory_space<vmem>>, vector<8x128xf32>
    %c0_5 = arith.constant 0 : index
    %c0_6 = arith.constant 0 : index
    %6 = vector.load %arg4[%c0_5, %c0_6] : memref<128x128xf32, #tpu.memory_space<vmem>>, vector<128x128xf32>
    %cst = arith.constant dense<0.000000e+00> : vector<8x128xf32>
    %7 = tpu.matmul %4, %6, %cst {dimension_numbers = #tpu.dot_dimension_numbers<[1], [0], [0], [1], [0, 0, 1, 1], [], []>} : vector<8x128xf32>, vector<128x128xf32>, vector<8x128xf32> -> vector<8x128xf32>
    %c0_7 = arith.constant 0 : index
    %c0_8 = arith.constant 0 : index
    %8 = vector.load %arg5[%c0_7, %c0_8] : memref<128x128xf32, #tpu.memory_space<vmem>>, vector<128x128xf32>
    %cst_9 = arith.constant dense<0.000000e+00> : vector<8x128xf32>
    %9 = tpu.matmul %5, %8, %cst_9 {dimension_numbers = #tpu.dot_dimension_numbers<[1], [0], [0], [1], [0, 0, 1, 1], [], []>} : vector<8x128xf32>, vector<128x128xf32>, vector<8x128xf32> -> vector<8x128xf32>
    %10 = arith.addf %7, %9 : vector<8x128xf32>
    %c0_10 = arith.constant 0 : index
    %c0_11 = arith.constant 0 : index
    %11 = vector.load %arg6[%c0_10, %c0_11] : memref<1x128xf32, #tpu.memory_space<vmem>>, vector<1x128xf32>
    %12 = vector.broadcast %11 : vector<1x128xf32> to vector<8x128xf32>
    %13 = arith.addf %10, %12 : vector<8x128xf32>
    %c0_12 = arith.constant 0 : index
    %c0_13 = arith.constant 0 : index
    %14 = vector.load %arg7[%c0_12, %c0_13] : memref<128x128xf32, #tpu.memory_space<vmem>>, vector<128x128xf32>
    %cst_14 = arith.constant dense<0.000000e+00> : vector<8x128xf32>
    %15 = tpu.matmul %13, %14, %cst_14 {dimension_numbers = #tpu.dot_dimension_numbers<[1], [0], [0], [1], [0, 0, 1, 1], [], []>} : vector<8x128xf32>, vector<128x128xf32>, vector<8x128xf32> -> vector<8x128xf32>
    %c0_15 = arith.constant 0 : index
    %c0_16 = arith.constant 0 : index
    %16 = vector.load %arg8[%c0_15, %c0_16] : memref<1x128xf32, #tpu.memory_space<vmem>>, vector<1x128xf32>
    %17 = vector.broadcast %16 : vector<1x128xf32> to vector<8x128xf32>
    %18 = arith.addf %15, %17 : vector<8x128xf32>
    %19 = tpu.iota {dimensions = array<i32: 1>} : vector<8x128xi32>
    %c8_i32 = arith.constant 8 : i32
    %20 = vector.broadcast %c8_i32 : i32 to vector<8x128xi32>
    %21 = arith.cmpi slt, %19, %20 : vector<8x128xi32>
    %cst_17 = arith.constant -1.000000e+30 : f32
    %22 = vector.broadcast %cst_17 : f32 to vector<8x128xf32>
    %23 = arith.select %21, %18, %22 : vector<8x128xi1>, vector<8x128xf32>
    %cst_18 = arith.constant dense<0xFF800000> : vector<8xf32>
    %24 = vector.multi_reduction <maximumf>, %23, %cst_18 [1] : vector<8x128xf32> to vector<8xf32>
    %25 = vector.shape_cast %24 : vector<8xf32> to vector<8x1xf32>
    %26 = vector.broadcast %25 : vector<8x1xf32> to vector<8x128xf32>
    %27 = arith.subf %23, %26 : vector<8x128xf32>
    %28 = math.exp %27 : vector<8x128xf32>
    %cst_19 = arith.constant dense<0.000000e+00> : vector<8xf32>
    %29 = vector.multi_reduction <add>, %28, %cst_19 [1] : vector<8x128xf32> to vector<8xf32>
    %30 = vector.shape_cast %29 : vector<8xf32> to vector<8x1xf32>
    %31 = math.log %30 : vector<8x1xf32>
    %32 = vector.broadcast %31 : vector<8x1xf32> to vector<8x128xf32>
    %33 = arith.subf %27, %32 : vector<8x128xf32>
    %c0_20 = arith.constant 0 : index
    %c0_21 = arith.constant 0 : index
    %c0_22 = arith.constant 0 : index
    %34 = vector.load %arg9[%c0_20, %c0_21, %c0_22] : memref<1x8x128xf32, #tpu.memory_space<vmem>>, vector<1x8x128xf32>
    %35 = vector.shape_cast %34 : vector<1x8x128xf32> to vector<8x128xf32>
    %36 = vector.shape_cast %33 : vector<8x128xf32> to vector<1x8x128xf32>
    tpu.vector_store %arg9[%c0_20, %c0_21, %c0_22], %36 {strides = array<i32>} : memref<1x8x128xf32, #tpu.memory_space<vmem>>, vector<1x8x128xf32>,
    %c0_23 = arith.constant 0 : index
    %c0_24 = arith.constant 0 : index
    %37 = vector.load %arg11[%c0_23, %c0_24] : memref<8x128xf32, #tpu.memory_space<vmem>>, vector<8x128xf32>
    tpu.vector_store %arg11[%c0_23, %c0_24], %13 {strides = array<i32>} : memref<8x128xf32, #tpu.memory_space<vmem>>, vector<8x128xf32>,
    %c7_i32 = arith.constant 7 : i32
    %38 = arith.cmpi eq, %arg1, %c7_i32 : i32
    %39 = arith.extui %38 : i1 to i32
    %c0_i32_25 = arith.constant 0 : i32
    %40 = arith.cmpi ne, %39, %c0_i32_25 : i32
    scf.if %40 {
      %c0_26 = arith.constant 0 : index
      %c0_27 = arith.constant 0 : index
      %41 = vector.load %arg10[%c0_26, %c0_27] : memref<8x128xf32, #tpu.memory_space<vmem>>, vector<8x128xf32>
      tpu.vector_store %arg10[%c0_26, %c0_27], %13 {strides = array<i32>} : memref<8x128xf32, #tpu.memory_space<vmem>>, vector<8x128xf32>,
    } else {
    }
    return
  }
  func.func @transform_0(%arg0: i32, %arg1: i32) -> (i32, i32, i32) {
    %c0_i32 = arith.constant 0 : i32
    %c0_i32_0 = arith.constant 0 : i32
    return %arg1, %arg0, %c0_i32 : i32, i32, i32
  }
  func.func @transform_1(%arg0: i32, %arg1: i32) -> (i32, i32) {
    %c0_i32 = arith.constant 0 : i32
    %c0_i32_0 = arith.constant 0 : i32
    return %arg0, %c0_i32 : i32, i32
  }
  func.func @transform_2(%arg0: i32, %arg1: i32) -> (i32, i32) {
    %c0_i32 = arith.constant 0 : i32
    %c0_i32_0 = arith.constant 0 : i32
    %c0_i32_1 = arith.constant 0 : i32
    return %c0_i32, %c0_i32_0 : i32, i32
  }
  func.func @transform_3(%arg0: i32, %arg1: i32) -> (i32, i32) {
    %c0_i32 = arith.constant 0 : i32
    %c0_i32_0 = arith.constant 0 : i32
    %c0_i32_1 = arith.constant 0 : i32
    return %c0_i32, %c0_i32_0 : i32, i32
  }
  func.func @transform_4(%arg0: i32, %arg1: i32) -> (i32, i32) {
    %c0_i32 = arith.constant 0 : i32
    %c0_i32_0 = arith.constant 0 : i32
    %c0_i32_1 = arith.constant 0 : i32
    return %c0_i32, %c0_i32_0 : i32, i32
  }
  func.func @transform_5(%arg0: i32, %arg1: i32) -> (i32, i32) {
    %c0_i32 = arith.constant 0 : i32
    %c0_i32_0 = arith.constant 0 : i32
    %c0_i32_1 = arith.constant 0 : i32
    return %c0_i32, %c0_i32_0 : i32, i32
  }
  func.func @transform_6(%arg0: i32, %arg1: i32) -> (i32, i32) {
    %c0_i32 = arith.constant 0 : i32
    %c0_i32_0 = arith.constant 0 : i32
    %c0_i32_1 = arith.constant 0 : i32
    return %c0_i32, %c0_i32_0 : i32, i32
  }
  func.func @transform_7(%arg0: i32, %arg1: i32) -> (i32, i32, i32) {
    %c0_i32 = arith.constant 0 : i32
    %c0_i32_0 = arith.constant 0 : i32
    return %arg1, %arg0, %c0_i32 : i32, i32, i32
  }
  func.func @transform_8(%arg0: i32, %arg1: i32) -> (i32, i32) {
    %c0_i32 = arith.constant 0 : i32
    %c0_i32_0 = arith.constant 0 : i32
    return %arg0, %c0_i32 : i32, i32
  }
}

</mosaic_0001>

<llo_original>
// kernel: rnn_sequence_forward.1
$region0: #{rnn_sequence_forward.1}
  #allocation0 [shape = 'u32[]', space=smem, size = 0x4, offset = 0x4, fixed_abs, tag = 'smem constant byte address 0x4 - core index']
  #allocation1 [shape = 'u32[144,128]{1,0:T(1,128)}', space=vmem, size = 0x12000, scoped, tag = 'internal scratch']
  #allocation2 [shape = 'f32[8,128]{1,0:T(8,128)}', space=vmem, size = 0x1000, scoped, tag = 'scratch operand']
  %s0 = inlined_call_operand.vmem [shape: f32[8,8,128], index: 0, kind: input, shape index: {}]
  %s1 = inlined_call_operand.vmem [shape: f32[8,128], index: 1, kind: input, shape index: {}]
  %s2 = inlined_call_operand.vmem [shape: f32[128,128], index: 2, kind: input, shape index: {}]
  %s3 = inlined_call_operand.vmem [shape: f32[128,128], index: 3, kind: input, shape index: {}]
  %s4 = inlined_call_operand.vmem [shape: f32[1,128], index: 4, kind: input, shape index: {}]
  %s5 = inlined_call_operand.vmem [shape: f32[128,128], index: 5, kind: input, shape index: {}]
  %s6 = inlined_call_operand.vmem [shape: f32[1,128], index: 6, kind: input, shape index: {}]
  %s7 = inlined_call_operand.vmem [shape: f32[8,8,128], index: 7, kind: output, shape index: {0}]
  %s8 = inlined_call_operand.vmem [shape: f32[8,128], index: 8, kind: output, shape index: {1}]
  %9 = xla_tuple %s7, %s8
  %s10 = sld [smem:[#allocation0]]
  $region77: #{rnn_sequence_forward.1} parent=0
    _
  %s12 = ssub.s32 1, %s10
  %s13 = scalar_select 0, %s12, %s10
  loop: start=0, step=1, limit=10
  $region2: #{rnn_sequence_forward.1} parent=0 // loop_pre_header
    _
  $region3: #{rnn_sequence_forward.1} parent=0 // loop_header
    %s15 = sphi 0, %s19
    %p16 = scmp.ge.s32.totalorder %s15, 10
    %s22 = sphi 0, %s34
    %s23 = sphi 0, %s30
    %s24 = sphi 0, %s22
    %s25 = sphi 0, %s23
    %s26 = sphi 0, %s24
    %s27 = sphi 0, %s25
    %s39 = sphi 0, %s41
    %s42 = sphi 0, %s39
    %s43 = sphi 0, %s42
    %s59 = sphi 0, %s43
    %s65 = sphi 0, %s67
    %s68 = sphi 0, %s65
    %s69 = sphi 0, %s68
    %s85 = sphi 0, %s69
    %s89 = sphi 0, %s89
    %s91 = sphi 0, %s89
    %s92 = sphi 0, %s91
    %s106 = sphi 0, %s92
    %s110 = sphi 0, %s110
    %s112 = sphi 0, %s110
    %s113 = sphi 0, %s112
    %s127 = sphi 0, %s113
    %s131 = sphi 0, %s131
    %s133 = sphi 0, %s131
    %s134 = sphi 0, %s133
    %s148 = sphi 0, %s134
    %s152 = sphi 0, %s152
    %s154 = sphi 0, %s152
    %s155 = sphi 0, %s154
    %s169 = sphi 0, %s155
    %s173 = sphi 0, %s173
    %s175 = sphi 0, %s173
    %s176 = sphi 0, %s175
    %s190 = sphi 0, %s176
    %s198 = sphi 0, %s200
    %s201 = sphi 0, %s198
    %s202 = sphi 0, %s201
    %s218 = sphi 0, %s202
    %s224 = sphi 0, %s226
    %s227 = sphi 0, %s224
    %s228 = sphi 0, %s227
    %s244 = sphi 0, %s228
  $region4: #{rnn_sequence_forward.1} parent=0 // loop_header_branch
    %18 = sbr.rel (%p16) target = $region8
  $region5: #{rnn_sequence_forward.1} parent=0 // loop_body
    %s20 = ssub.s32 %s15, 1
    %s21 = ssub.s32 %s15, 2
    %s28 = sadd.s32 1, %s23
    %p29 = scmp.ge.s32.totalorder %s28, 8
    %s30 = scalar_select %p29, 0, %s28
    %s31 = sadd.s32 1, %s22
    %s32 = scalar_select %p29, %s31, %s22
    %p33 = scmp.ge.s32.totalorder %s32, 1
    %s34 = scalar_select %p33, 0, %s32
    %s35 = ssub.s32 %s23, %s30
    %s36 = ssub.s32 %s22, %s34
    %s37 = sor.u32 %s35, %s36
    %p38 = scmp.eq.s32.totalorder %s37, 0
    %s40 = sadd.s32 %s39, 1
    %s41 = scalar_select %p38, %s39, %s40
    %p44 = pneg %p38
    %p45 = scmp.eq.s32.totalorder %s15, 7
    %p46 = por %p44, %p45
    %p47 = scmp.ne.s32.totalorder %s39, %s42
    %p48 = scmp.eq.s32.totalorder %s15, 0
    %p49 = por %p47, %p48
    %p50 = scmp.ne.s32.totalorder %s39, %s42
    %p51 = scmp.eq.s32.totalorder %s20, 7
    %p52 = por %p50, %p51
    %p53 = scmp.ne.s32.totalorder %s42, %s43
    %p54 = scmp.eq.s32.totalorder %s20, 0
    %p55 = por %p53, %p54
    %p56 = scmp.ne.s32.totalorder %s42, %s43
    %p57 = scmp.eq.s32.totalorder %s21, 7
    %p58 = por %p56, %p57
    %p60 = scmp.ne.s32.totalorder %s43, %s59
    %p61 = scmp.eq.s32.totalorder %s21, 0
    %p62 = por %p60, %p61
    %s63 = ssub.s32 %s22, %s34
    %p64 = scmp.eq.s32.totalorder %s63, 0
    %s66 = sadd.s32 %s65, 1
    %s67 = scalar_select %p64, %s65, %s66
    %p70 = pneg %p64
    %p71 = scmp.eq.s32.totalorder %s15, 7
    %p72 = por %p70, %p71
    %p73 = scmp.ne.s32.totalorder %s65, %s68
    %p74 = scmp.eq.s32.totalorder %s15, 0
    %p75 = por %p73, %p74
    %p76 = scmp.ne.s32.totalorder %s65, %s68
    %p77 = scmp.eq.s32.totalorder %s20, 7
    %p78 = por %p76, %p77
    %p79 = scmp.ne.s32.totalorder %s68, %s69
    %p80 = scmp.eq.s32.totalorder %s20, 0
    %p81 = por %p79, %p80
    %p82 = scmp.ne.s32.totalorder %s68, %s69
    %p83 = scmp.eq.s32.totalorder %s21, 7
    %p84 = por %p82, %p83
    %p86 = scmp.ne.s32.totalorder %s69, %s85
    %p87 = scmp.eq.s32.totalorder %s21, 0
    %p88 = por %p86, %p87
    %s90 = sadd.s32 %s89, 1
    %p93 = scmp.eq.s32.totalorder %s15, 7
    %p94 = scmp.ne.s32.totalorder %s89, %s91
    %p95 = scmp.eq.s32.totalorder %s15, 0
    %p96 = por %p94, %p95
    %p97 = scmp.ne.s32.totalorder %s89, %s91
    %p98 = scmp.eq.s32.totalorder %s20, 7
    %p99 = por %p97, %p98
    %p100 = scmp.ne.s32.totalorder %s91, %s92
    %p101 = scmp.eq.s32.totalorder %s20, 0
    %p102 = por %p100, %p101
    %p103 = scmp.ne.s32.totalorder %s91, %s92
    %p104 = scmp.eq.s32.totalorder %s21, 7
    %p105 = por %p103, %p104
    %p107 = scmp.ne.s32.totalorder %s92, %s106
    %p108 = scmp.eq.s32.totalorder %s21, 0
    %p109 = por %p107, %p108
    %s111 = sadd.s32 %s110, 1
    %p114 = scmp.eq.s32.totalorder %s15, 7
    %p115 = scmp.ne.s32.totalorder %s110, %s112
    %p116 = scmp.eq.s32.totalorder %s15, 0
    %p117 = por %p115, %p116
    %p118 = scmp.ne.s32.totalorder %s110, %s112
    %p119 = scmp.eq.s32.totalorder %s20, 7
    %p120 = por %p118, %p119
    %p121 = scmp.ne.s32.totalorder %s112, %s113
    %p122 = scmp.eq.s32.totalorder %s20, 0
    %p123 = por %p121, %p122
    %p124 = scmp.ne.s32.totalorder %s112, %s113
    %p125 = scmp.eq.s32.totalorder %s21, 7
    %p126 = por %p124, %p125
    %p128 = scmp.ne.s32.totalorder %s113, %s127
    %p129 = scmp.eq.s32.totalorder %s21, 0
    %p130 = por %p128, %p129
    %s132 = sadd.s32 %s131, 1
    %p135 = scmp.eq.s32.totalorder %s15, 7
    %p136 = scmp.ne.s32.totalorder %s131, %s133
    %p137 = scmp.eq.s32.totalorder %s15, 0
    %p138 = por %p136, %p137
    %p139 = scmp.ne.s32.totalorder %s131, %s133
    %p140 = scmp.eq.s32.totalorder %s20, 7
    %p141 = por %p139, %p140
    %p142 = scmp.ne.s32.totalorder %s133, %s134
    %p143 = scmp.eq.s32.totalorder %s20, 0
    %p144 = por %p142, %p143
    %p145 = scmp.ne.s32.totalorder %s133, %s134
    %p146 = scmp.eq.s32.totalorder %s21, 7
    %p147 = por %p145, %p146
    %p149 = scmp.ne.s32.totalorder %s134, %s148
    %p150 = scmp.eq.s32.totalorder %s21, 0
    %p151 = por %p149, %p150
    %s153 = sadd.s32 %s152, 1
    %p156 = scmp.eq.s32.totalorder %s15, 7
    %p157 = scmp.ne.s32.totalorder %s152, %s154
    %p158 = scmp.eq.s32.totalorder %s15, 0
    %p159 = por %p157, %p158
    %p160 = scmp.ne.s32.totalorder %s152, %s154
    %p161 = scmp.eq.s32.totalorder %s20, 7
    %p162 = por %p160, %p161
    %p163 = scmp.ne.s32.totalorder %s154, %s155
    %p164 = scmp.eq.s32.totalorder %s20, 0
    %p165 = por %p163, %p164
    %p166 = scmp.ne.s32.totalorder %s154, %s155
    %p167 = scmp.eq.s32.totalorder %s21, 7
    %p168 = por %p166, %p167
    %p170 = scmp.ne.s32.totalorder %s155, %s169
    %p171 = scmp.eq.s32.totalorder %s21, 0
    %p172 = por %p170, %p171
    %s174 = sadd.s32 %s173, 1
    %p177 = scmp.eq.s32.totalorder %s15, 7
    %p178 = scmp.ne.s32.totalorder %s173, %s175
    %p179 = scmp.eq.s32.totalorder %s15, 0
    %p180 = por %p178, %p179
    %p181 = scmp.ne.s32.totalorder %s173, %s175
    %p182 = scmp.eq.s32.totalorder %s20, 7
    %p183 = por %p181, %p182
    %p184 = scmp.ne.s32.totalorder %s175, %s176
    %p185 = scmp.eq.s32.totalorder %s20, 0
    %p186 = por %p184, %p185
    %p187 = scmp.ne.s32.totalorder %s175, %s176
    %p188 = scmp.eq.s32.totalorder %s21, 7
    %p189 = por %p187, %p188
    %p191 = scmp.ne.s32.totalorder %s176, %s190
    %p192 = scmp.eq.s32.totalorder %s21, 0
    %p193 = por %p191, %p192
    %s194 = ssub.s32 %s23, %s30
    %s195 = ssub.s32 %s22, %s34
    %s196 = sor.u32 %s194, %s195
    %p197 = scmp.eq.s32.totalorder %s196, 0
    %s199 = sadd.s32 %s198, 1
    %s200 = scalar_select %p197, %s198, %s199
    %p203 = pneg %p197
    %p204 = scmp.eq.s32.totalorder %s15, 7
    %p205 = por %p203, %p204
    %p206 = scmp.ne.s32.totalorder %s198, %s201
    %p207 = scmp.eq.s32.totalorder %s15, 0
    %p208 = por %p206, %p207
    %p209 = scmp.ne.s32.totalorder %s198, %s201
    %p210 = scmp.eq.s32.totalorder %s20, 7
    %p211 = por %p209, %p210
    %p212 = scmp.ne.s32.totalorder %s201, %s202
    %p213 = scmp.eq.s32.totalorder %s20, 0
    %p214 = por %p212, %p213
    %p215 = scmp.ne.s32.totalorder %s201, %s202
    %p216 = scmp.eq.s32.totalorder %s21, 7
    %p217 = por %p215, %p216
    %p219 = scmp.ne.s32.totalorder %s202, %s218
    %p220 = scmp.eq.s32.totalorder %s21, 0
    %p221 = por %p219, %p220
    %s222 = ssub.s32 %s22, %s34
    %p223 = scmp.eq.s32.totalorder %s222, 0
    %s225 = sadd.s32 %s224, 1
    %s226 = scalar_select %p223, %s224, %s225
    %p229 = pneg %p223
    %p230 = scmp.eq.s32.totalorder %s15, 7
    %p231 = por %p229, %p230
    %p232 = scmp.ne.s32.totalorder %s224, %s227
    %p233 = scmp.eq.s32.totalorder %s15, 0
    %p234 = por %p232, %p233
    %p235 = scmp.ne.s32.totalorder %s224, %s227
    %p236 = scmp.eq.s32.totalorder %s20, 7
    %p237 = por %p235, %p236
    %p238 = scmp.ne.s32.totalorder %s227, %s228
    %p239 = scmp.eq.s32.totalorder %s20, 0
    %p240 = por %p238, %p239
    %p241 = scmp.ne.s32.totalorder %s227, %s228
    %p242 = scmp.eq.s32.totalorder %s21, 7
    %p243 = por %p241, %p242
    %p245 = scmp.ne.s32.totalorder %s228, %s244
    %p246 = scmp.eq.s32.totalorder %s21, 0
    %p247 = por %p245, %p246
    %p248 = scmp.le.s32.totalorder 1, %s15
    %p249 = scmp.lt.s32.totalorder %s15, 9
    %p250 = pnand %p248, %p249
    %p251 = pneg %p250
    // Predicated region
    $region9: #{rnn_sequence_forward.1} parent=5 // pred_check
      _
    $region10: #{rnn_sequence_forward.1} parent=5 // pred_check_branch
      %253 = sbr.rel (%p250) target = $region12
    $region11: #{rnn_sequence_forward.1} parent=5 // pred_region
      %s254 = ssub.s32 %s15, 1
      // Predicated region
      $region13: #{rnn_sequence_forward.1} parent=11 // pred_check
        %p255 = pneg %p81
      $region14: #{rnn_sequence_forward.1} parent=11 // pred_check_branch
        %257 = sbr.rel (%p255) target = $region16
      $region15: #{rnn_sequence_forward.1} parent=11 // pred_region
        %p258 = scmp.lt.s32.totalorder %s24, 0
        %s259 = scalar_select %p258, %s24, 0
        %s260 = smul.addr %s259, 8
        %s261 = scalar_lea.vmem %s1, %s260
      $region16: #{rnn_sequence_forward.1} parent=11 // pred_fallthru
        _
      // Predicated region
      $region17: #{rnn_sequence_forward.1} parent=11 // pred_check
        %p262 = pneg %p102
      $region18: #{rnn_sequence_forward.1} parent=11 // pred_check_branch
        %264 = sbr.rel (%p262) target = $region20
      $region19: #{rnn_sequence_forward.1} parent=11 // pred_region
        _
      $region20: #{rnn_sequence_forward.1} parent=11 // pred_fallthru
        _
      // Predicated region
      $region21: #{rnn_sequence_forward.1} parent=11 // pred_check
        %p265 = pneg %p123
      $region22: #{rnn_sequence_forward.1} parent=11 // pred_check_branch
        %267 = sbr.rel (%p265) target = $region24
      $region23: #{rnn_sequence_forward.1} parent=11 // pred_region
        _
      $region24: #{rnn_sequence_forward.1} parent=11 // pred_fallthru
        _
      // Predicated region
      $region25: #{rnn_sequence_forward.1} parent=11 // pred_check
        %p268 = pneg %p144
      $region26: #{rnn_sequence_forward.1} parent=11 // pred_check_branch
        %270 = sbr.rel (%p268) target = $region28
      $region27: #{rnn_sequence_forward.1} parent=11 // pred_region
        _
      $region28: #{rnn_sequence_forward.1} parent=11 // pred_fallthru
        _
      // Predicated region
      $region29: #{rnn_sequence_forward.1} parent=11 // pred_check
        %p271 = pneg %p165
      $region30: #{rnn_sequence_forward.1} parent=11 // pred_check_branch
        %273 = sbr.rel (%p271) target = $region32
      $region31: #{rnn_sequence_forward.1} parent=11 // pred_region
        _
      $region32: #{rnn_sequence_forward.1} parent=11 // pred_fallthru
        _
      // Predicated region
      $region33: #{rnn_sequence_forward.1} parent=11 // pred_check
        %p274 = pneg %p186
      $region34: #{rnn_sequence_forward.1} parent=11 // pred_check_branch
        %276 = sbr.rel (%p274) target = $region36
      $region35: #{rnn_sequence_forward.1} parent=11 // pred_region
        _
      $region36: #{rnn_sequence_forward.1} parent=11 // pred_fallthru
        _
    $region12: #{rnn_sequence_forward.1} parent=5 // pred_fallthru
      _
    %p277 = scmp.lt.s32.totalorder %s15, 8
    // Predicated region
    $region37: #{rnn_sequence_forward.1} parent=5 // pred_check
      %p278 = pneg %p277
    $region38: #{rnn_sequence_forward.1} parent=5 // pred_check_branch
      %280 = sbr.rel (%p278) target = $region40
    $region39: #{rnn_sequence_forward.1} parent=5 // pred_region
      // Predicated region
      $region41: #{rnn_sequence_forward.1} parent=39 // pred_check
        %p281 = pneg %p49
      $region42: #{rnn_sequence_forward.1} parent=39 // pred_check_branch
        %283 = sbr.rel (%p281) target = $region44
      $region43: #{rnn_sequence_forward.1} parent=39 // pred_region
        %p284 = scmp.lt.s32.totalorder %s23, 7
        %s285 = scalar_select %p284, %s23, 7
        %p286 = scmp.lt.s32.totalorder %s22, 0
        %s287 = scalar_select %p286, %s22, 0
        %s288 = sadd.s32 %s287, %s285
        %s289 = smul.addr %s288, 8
        %s290 = scalar_lea.vmem %s0, %s289
      $region44: #{rnn_sequence_forward.1} parent=39 // pred_fallthru
        _
    $region40: #{rnn_sequence_forward.1} parent=5 // pred_fallthru
      _
    %p291 = scmp.le.s32.totalorder 1, %s15
    %p292 = scmp.lt.s32.totalorder %s15, 9
    %p293 = pnand %p291, %p292
    %p294 = pneg %p293
    // Predicated region
    $region45: #{rnn_sequence_forward.1} parent=5 // pred_check
      _
    $region46: #{rnn_sequence_forward.1} parent=5 // pred_check_branch
      %296 = sbr.rel (%p293) target = $region48
    $region47: #{rnn_sequence_forward.1} parent=5 // pred_region
      %s297 = ssub.s32 %s15, 1
      %p298 = scmp.lt.s32.totalorder %s25, 7
      %s299 = scalar_select %p298, %s25, 7
      %p300 = scmp.lt.s32.totalorder %s24, 0
      %s301 = scalar_select %p300, %s24, 0
      %s302 = sadd.s32 %s301, %s299
      %s303 = smul.addr %s302, 8
      %s304 = scalar_lea.vmem %s0, %s303
      %p305 = pneg %p55
      %p306 = pneg %p52
      %p307 = scmp.lt.s32.totalorder %s24, 0
      %s308 = scalar_select %p307, %s24, 0
      %s309 = smul.addr %s308, 8
      %s310 = scalar_lea.vmem %s1, %s309
      %p311 = pneg %p81
      %p312 = pneg %p78
      %p313 = pneg %p102
      %p314 = pneg %p99
      %p315 = pneg %p123
      %p316 = pneg %p120
      %p317 = pneg %p144
      %p318 = pneg %p141
      %p319 = pneg %p165
      %p320 = pneg %p162
      %p321 = pneg %p186
      %p322 = pneg %p183
      %p323 = pneg %p214
      %p324 = pneg %p211
      %p325 = scmp.lt.s32.totalorder %s25, 7
      %s326 = scalar_select %p325, %s25, 7
      %p327 = scmp.lt.s32.totalorder %s24, 0
      %s328 = scalar_select %p327, %s24, 0
      %s329 = sadd.s32 %s328, %s326
      %s330 = smul.addr %s329, 8
      %s331 = scalar_lea.vmem %s7, %s330
      %p332 = pneg %p240
      %p333 = pneg %p237
      %p334 = scmp.lt.s32.totalorder %s24, 0
      %s335 = scalar_select %p334, %s24, 0
      %s336 = smul.addr %s335, 8
      %s337 = scalar_lea.vmem %s8, %s336
      %p338 = scmp.lt.s32.totalorder %s25, 7
      %s339 = scalar_select %p338, %s25, 7
      %p340 = scmp.lt.s32.totalorder %s24, 0
      %s341 = scalar_select %p340, %s24, 0
      %s342 = sadd.s32 %s341, %s339
      %s343 = smul.addr %s342, 8
      %s344 = scalar_lea.vmem %s0, %s343
      %p345 = scmp.lt.s32.totalorder %s24, 0
      %s346 = scalar_select %p345, %s24, 0
      %s347 = smul.addr %s346, 8
      %s348 = scalar_lea.vmem %s1, %s347
      %p349 = scmp.lt.s32.totalorder %s25, 7
      %s350 = scalar_select %p349, %s25, 7
      %p351 = scmp.lt.s32.totalorder %s24, 0
      %s352 = scalar_select %p351, %s24, 0
      %s353 = sadd.s32 %s352, %s350
      %s354 = smul.addr %s353, 8
      %s355 = scalar_lea.vmem %s7, %s354
      %p356 = scmp.lt.s32.totalorder %s24, 0
      %s357 = scalar_select %p356, %s24, 0
      %s358 = smul.addr %s357, 8
      %s359 = scalar_lea.vmem %s8, %s358
      %p360 = scmp.eq.s32.totalorder %s25, 0
      // Predicated region
      $region49: #{rnn_sequence_forward.1} parent=47 // pred_check
        %p361 = pneg %p360
      $region50: #{rnn_sequence_forward.1} parent=47 // pred_check_branch
        %363 = sbr.rel (%p361) target = $region52
      $region51: #{rnn_sequence_forward.1} parent=47 // pred_region
        %v364 = vld [vmem:[%s348] sm:$0xff]
        %365 = vst [vmem:[#allocation2] sm:$0xff] %v364
      $region52: #{rnn_sequence_forward.1} parent=47 // pred_fallthru
        _
      %v366 = vld [vmem:[%s344] sm:$0xff]
      %v367 = vld [vmem:[#allocation2] sm:$0xff]
      %v368 = vld [vmem:[%s2] sm:$0xff]
      %v369 = vld [vmem:[%s2 + $0x8] sm:$0xff]
      %v370 = vld [vmem:[%s2 + $0x10] sm:$0xff]
      %v371 = vld [vmem:[%s2 + $0x18] sm:$0xff]
      %v372 = vld [vmem:[%s2 + $0x20] sm:$0xff]
      %v373 = vld [vmem:[%s2 + $0x28] sm:$0xff]
      %v374 = vld [vmem:[%s2 + $0x30] sm:$0xff]
      %v375 = vld [vmem:[%s2 + $0x38] sm:$0xff]
      %v376 = vld [vmem:[%s2 + $0x40] sm:$0xff]
      %v377 = vld [vmem:[%s2 + $0x48] sm:$0xff]
      %v378 = vld [vmem:[%s2 + $0x50] sm:$0xff]
      %v379 = vld [vmem:[%s2 + $0x58] sm:$0xff]
      %v380 = vld [vmem:[%s2 + $0x60] sm:$0xff]
      %v381 = vld [vmem:[%s2 + $0x68] sm:$0xff]
      %v382 = vld [vmem:[%s2 + $0x70] sm:$0xff]
      %v383 = vld [vmem:[%s2 + $0x78] sm:$0xff]
      %v384 = vld [vmem:[%s3] sm:$0xff]
      %v385 = vld [vmem:[%s3 + $0x8] sm:$0xff]
      %v386 = vld [vmem:[%s3 + $0x10] sm:$0xff]
      %v387 = vld [vmem:[%s3 + $0x18] sm:$0xff]
      %v388 = vld [vmem:[%s3 + $0x20] sm:$0xff]
      %v389 = vld [vmem:[%s3 + $0x28] sm:$0xff]
      %v390 = vld [vmem:[%s3 + $0x30] sm:$0xff]
      %v391 = vld [vmem:[%s3 + $0x38] sm:$0xff]
      %v392 = vld [vmem:[%s3 + $0x40] sm:$0xff]
      %v393 = vld [vmem:[%s3 + $0x48] sm:$0xff]
      %v394 = vld [vmem:[%s3 + $0x50] sm:$0xff]
      %v395 = vld [vmem:[%s3 + $0x58] sm:$0xff]
      %v396 = vld [vmem:[%s3 + $0x60] sm:$0xff]
      %v397 = vld [vmem:[%s3 + $0x68] sm:$0xff]
      %v398 = vld [vmem:[%s3 + $0x70] sm:$0xff]
      %v399 = vld [vmem:[%s3 + $0x78] sm:$0xff]
      %400 = vmatprep.subr.mxu0 0.0
      %401 = vmatpush1.msra.mxu0 %v384
      %402 = vmatprep.subr.mxu0 0.0
      %403 = vmatpush1.msra.mxu0 %v385
      %404 = vmatprep.subr.mxu0 0.0
      %405 = vmatpush1.msra.mxu0 %v386
      %406 = vmatprep.subr.mxu0 0.0
      %407 = vmatpush1.msra.mxu0 %v387
      %408 = vmatprep.subr.mxu0 0.0
      %409 = vmatpush1.msra.mxu0 %v388
      %410 = vmatprep.subr.mxu0 0.0
      %411 = vmatpush1.msra.mxu0 %v389
      %412 = vmatprep.subr.mxu0 0.0
      %413 = vmatpush1.msra.mxu0 %v390
      %414 = vmatprep.subr.mxu0 0.0
      %415 = vmatpush1.msra.mxu0 %v391
      %416 = vmatprep.subr.mxu0 0.0
      %417 = vmatpush1.msra.mxu0 %v392
      %418 = vmatprep.subr.mxu0 0.0
      %419 = vmatpush1.msra.mxu0 %v393
      %420 = vmatprep.subr.mxu0 0.0
      %421 = vmatpush1.msra.mxu0 %v394
      %422 = vmatprep.subr.mxu0 0.0
      %423 = vmatpush1.msra.mxu0 %v395
      %424 = vmatprep.subr.mxu0 0.0
      %425 = vmatpush1.msra.mxu0 %v396
      %426 = vmatprep.subr.mxu0 0.0
      %427 = vmatpush1.msra.mxu0 %v397
      %428 = vmatprep.subr.mxu0 0.0
      %429 = vmatpush1.msra.mxu0 %v398
      %430 = vmatprep.subr.mxu0 0.0
      %431 = vmatpush1.msra.mxu0 %v399
      %432 = vmatprep.subr.mxu0 0.0
      %433 = vmatpush1.msra.mxu0 0.0
      %434 = vmatprep.subr.mxu0 0.0
      %435 = vmatpush1.msra.mxu0 0.0
      %436 = vmatprep.subr.mxu0 0.0
      %437 = vmatpush1.msra.mxu0 0.0
      %438 = vmatprep.subr.mxu0 0.0
      %439 = vmatpush1.msra.mxu0 0.0
      %440 = vmatprep.subr.mxu0 0.0
      %441 = vmatpush1.msra.mxu0 0.0
      %442 = vmatprep.subr.mxu0 0.0
      %443 = vmatpush1.msra.mxu0 0.0
      %444 = vmatprep.subr.mxu0 0.0
      %445 = vmatpush1.msra.mxu0 0.0
      %446 = vmatprep.subr.mxu0 0.0
      %447 = vmatpush1.msra.mxu0 0.0
      %448 = vmatprep.subr.mxu0 0.0
      %449 = vmatpush1.msra.mxu0 0.0
      %450 = vmatprep.subr.mxu0 0.0
      %451 = vmatpush1.msra.mxu0 0.0
      %452 = vmatprep.subr.mxu0 0.0
      %453 = vmatpush1.msra.mxu0 0.0
      %454 = vmatprep.subr.mxu0 0.0
      %455 = vmatpush1.msra.mxu0 0.0
      %456 = vmatprep.subr.mxu0 0.0
      %457 = vmatpush1.msra.mxu0 0.0
      %458 = vmatprep.subr.mxu0 0.0
      %459 = vmatpush1.msra.mxu0 0.0
      %460 = vmatprep.subr.mxu0 0.0
      %461 = vmatpush1.msra.mxu0 0.0
      %462 = vmatprep.subr.mxu0 0.0
      %463 = vmatpush1.msra.mxu0 0.0
      %464 = vmatprep.mubr.f32.mxu0 0.0
      %465 = vmatmul.mubr.f32.gmra.mrb[0].mxu0 %v367
      %v466 = vpop.f32.mrb[0].mxu0
      %v467 = vadd.f32 0.0, %v466
      %v468 = vpop.f32.mrb[0].mxu0
      %469 = vdwg.mxu0
      %470 = vmatprep.subr.mxu0 0.0
      %471 = vmatpush1.msra.mxu0 %v368
      %472 = vmatprep.subr.mxu0 0.0
      %473 = vmatpush1.msra.mxu0 %v369
      %474 = vmatprep.subr.mxu0 0.0
      %475 = vmatpush1.msra.mxu0 %v370
      %476 = vmatprep.subr.mxu0 0.0
      %477 = vmatpush1.msra.mxu0 %v371
      %478 = vmatprep.subr.mxu0 0.0
      %479 = vmatpush1.msra.mxu0 %v372
      %480 = vmatprep.subr.mxu0 0.0
      %481 = vmatpush1.msra.mxu0 %v373
      %482 = vmatprep.subr.mxu0 0.0
      %483 = vmatpush1.msra.mxu0 %v374
      %484 = vmatprep.subr.mxu0 0.0
      %485 = vmatpush1.msra.mxu0 %v375
      %486 = vmatprep.subr.mxu0 0.0
      %487 = vmatpush1.msra.mxu0 %v376
      %488 = vmatprep.subr.mxu0 0.0
      %489 = vmatpush1.msra.mxu0 %v377
      %490 = vmatprep.subr.mxu0 0.0
      %491 = vmatpush1.msra.mxu0 %v378
      %492 = vmatprep.subr.mxu0 0.0
      %493 = vmatpush1.msra.mxu0 %v379
      %494 = vmatprep.subr.mxu0 0.0
      %495 = vmatpush1.msra.mxu0 %v380
      %496 = vmatprep.subr.mxu0 0.0
      %497 = vmatpush1.msra.mxu0 %v381
      %498 = vmatprep.subr.mxu0 0.0
      %499 = vmatpush1.msra.mxu0 %v382
      %500 = vmatprep.subr.mxu0 0.0
      %501 = vmatpush1.msra.mxu0 %v383
      %502 = vmatprep.subr.mxu0 0.0
      %503 = vmatpush1.msra.mxu0 0.0
      %504 = vmatprep.subr.mxu0 0.0
      %505 = vmatpush1.msra.mxu0 0.0
      %506 = vmatprep.subr.mxu0 0.0
      %507 = vmatpush1.msra.mxu0 0.0
      %508 = vmatprep.subr.mxu0 0.0
      %509 = vmatpush1.msra.mxu0 0.0
      %510 = vmatprep.subr.mxu0 0.0
      %511 = vmatpush1.msra.mxu0 0.0
      %512 = vmatprep.subr.mxu0 0.0
      %513 = vmatpush1.msra.mxu0 0.0
      %514 = vmatprep.subr.mxu0 0.0
      %515 = vmatpush1.msra.mxu0 0.0
      %516 = vmatprep.subr.mxu0 0.0
      %517 = vmatpush1.msra.mxu0 0.0
      %518 = vmatprep.subr.mxu0 0.0
      %519 = vmatpush1.msra.mxu0 0.0
      %520 = vmatprep.subr.mxu0 0.0
      %521 = vmatpush1.msra.mxu0 0.0
      %522 = vmatprep.subr.mxu0 0.0
      %523 = vmatpush1.msra.mxu0 0.0
      %524 = vmatprep.subr.mxu0 0.0
      %525 = vmatpush1.msra.mxu0 0.0
      %526 = vmatprep.subr.mxu0 0.0
      %527 = vmatpush1.msra.mxu0 0.0
      %528 = vmatprep.subr.mxu0 0.0
      %529 = vmatpush1.msra.mxu0 0.0
      %530 = vmatprep.subr.mxu0 0.0
      %531 = vmatpush1.msra.mxu0 0.0
      %532 = vmatprep.subr.mxu0 0.0
      %533 = vmatpush1.msra.mxu0 0.0
      %534 = vmatprep.mubr.f32.mxu0 0.0
      %535 = vmatmul.mubr.f32.gmra.mrb[0].mxu0 %v366
      %v536 = vpop.f32.mrb[0].mxu0
      %v537 = vadd.f32 %v467, %v536
      %v538 = vpop.f32.mrb[0].mxu0
      %539 = vdwg.mxu0
      %v540 = vld [vmem:[%s4] sm:$0x1]
      %v542 = vlaneseq
      %v543 = vshrl.u32 %v542, 7
      %v544 = vsub.s32 0, %v543
      %v545 = vrot.slane %v540, %v544
      %v547 = vadd.f32 %v537, %v545
      %v548 = vld [vmem:[%s5] sm:$0xff]
      %v549 = vld [vmem:[%s5 + $0x8] sm:$0xff]
      %v550 = vld [vmem:[%s5 + $0x10] sm:$0xff]
      %v551 = vld [vmem:[%s5 + $0x18] sm:$0xff]
      %v552 = vld [vmem:[%s5 + $0x20] sm:$0xff]
      %v553 = vld [vmem:[%s5 + $0x28] sm:$0xff]
      %v554 = vld [vmem:[%s5 + $0x30] sm:$0xff]
      %v555 = vld [vmem:[%s5 + $0x38] sm:$0xff]
      %v556 = vld [vmem:[%s5 + $0x40] sm:$0xff]
      %v557 = vld [vmem:[%s5 + $0x48] sm:$0xff]
      %v558 = vld [vmem:[%s5 + $0x50] sm:$0xff]
      %v559 = vld [vmem:[%s5 + $0x58] sm:$0xff]
      %v560 = vld [vmem:[%s5 + $0x60] sm:$0xff]
      %v561 = vld [vmem:[%s5 + $0x68] sm:$0xff]
      %v562 = vld [vmem:[%s5 + $0x70] sm:$0xff]
      %v563 = vld [vmem:[%s5 + $0x78] sm:$0xff]
      %v564 = vld [vmem:[%s6] sm:$0x1]
      %v566 = vlaneseq
      %v567 = vshrl.u32 %v566, 7
      %v568 = vsub.s32 0, %v567
      %v569 = vrot.slane %v564, %v568
      %571 = vmatprep.subr.mxu0 0.0
      %572 = vmatpush1.msra.mxu0 %v548
      %573 = vmatprep.subr.mxu0 0.0
      %574 = vmatpush1.msra.mxu0 %v549
      %575 = vmatprep.subr.mxu0 0.0
      %576 = vmatpush1.msra.mxu0 %v550
      %577 = vmatprep.subr.mxu0 0.0
      %578 = vmatpush1.msra.mxu0 %v551
      %579 = vmatprep.subr.mxu0 0.0
      %580 = vmatpush1.msra.mxu0 %v552
      %581 = vmatprep.subr.mxu0 0.0
      %582 = vmatpush1.msra.mxu0 %v553
      %583 = vmatprep.subr.mxu0 0.0
      %584 = vmatpush1.msra.mxu0 %v554
      %585 = vmatprep.subr.mxu0 0.0
      %586 = vmatpush1.msra.mxu0 %v555
      %587 = vmatprep.subr.mxu0 0.0
      %588 = vmatpush1.msra.mxu0 %v556
      %589 = vmatprep.subr.mxu0 0.0
      %590 = vmatpush1.msra.mxu0 %v557
      %591 = vmatprep.subr.mxu0 0.0
      %592 = vmatpush1.msra.mxu0 %v558
      %593 = vmatprep.subr.mxu0 0.0
      %594 = vmatpush1.msra.mxu0 %v559
      %595 = vmatprep.subr.mxu0 0.0
      %596 = vmatpush1.msra.mxu0 %v560
      %597 = vmatprep.subr.mxu0 0.0
      %598 = vmatpush1.msra.mxu0 %v561
      %599 = vmatprep.subr.mxu0 0.0
      %600 = vmatpush1.msra.mxu0 %v562
      %601 = vmatprep.subr.mxu0 0.0
      %602 = vmatpush1.msra.mxu0 %v563
      %603 = vmatprep.subr.mxu0 0.0
      %604 = vmatpush1.msra.mxu0 0.0
      %605 = vmatprep.subr.mxu0 0.0
      %606 = vmatpush1.msra.mxu0 0.0
      %607 = vmatprep.subr.mxu0 0.0
      %608 = vmatpush1.msra.mxu0 0.0
      %609 = vmatprep.subr.mxu0 0.0
      %610 = vmatpush1.msra.mxu0 0.0
      %611 = vmatprep.subr.mxu0 0.0
      %612 = vmatpush1.msra.mxu0 0.0
      %613 = vmatprep.subr.mxu0 0.0
      %614 = vmatpush1.msra.mxu0 0.0
      %615 = vmatprep.subr.mxu0 0.0
      %616 = vmatpush1.msra.mxu0 0.0
      %617 = vmatprep.subr.mxu0 0.0
      %618 = vmatpush1.msra.mxu0 0.0
      %619 = vmatprep.subr.mxu0 0.0
      %620 = vmatpush1.msra.mxu0 0.0
      %621 = vmatprep.subr.mxu0 0.0
      %622 = vmatpush1.msra.mxu0 0.0
      %623 = vmatprep.subr.mxu0 0.0
      %624 = vmatpush1.msra.mxu0 0.0
      %625 = vmatprep.subr.mxu0 0.0
      %626 = vmatpush1.msra.mxu0 0.0
      %627 = vmatprep.subr.mxu0 0.0
      %628 = vmatpush1.msra.mxu0 0.0
      %629 = vmatprep.subr.mxu0 0.0
      %630 = vmatpush1.msra.mxu0 0.0
      %631 = vmatprep.subr.mxu0 0.0
      %632 = vmatpush1.msra.mxu0 0.0
      %633 = vmatprep.subr.mxu0 0.0
      %634 = vmatpush1.msra.mxu0 0.0
      %635 = vmatprep.mubr.f32.mxu0 0.0
      %636 = vmatmul.mubr.f32.gmra.mrb[0].mxu0 %v547
      %v637 = vpop.f32.mrb[0].mxu0
      %v638 = vadd.f32 %v569, %v637
      %v639 = vpop.f32.mrb[0].mxu0
      %640 = vdwg.mxu0
      %v641 = vlaneseq
      %v642 = vand.u32 %v641, 127
      %vm643 = vcmp.lt.s32.totalorder %v642, 8
      %v644 = vsel %vm643, %v638, -1e+30
      %645 = vmax.xlane.f32.xlu0 %v644
      %v646 = vpop.xlane.xlu0 %645
      %v647 = vsub.f32 %v644, %v646
      %v648 = vmul.f32 %v647, 1.442695
      %v649 = vpow.pop %v648
      %650 = vadd.xlane.f32.xlu0 %v649
      %v651 = vpop.xlane.xlu0 %650
      %v652 = vlog2.pop %v651
      %v653 = vmul.f32 %v652, 0.6931472
      %v654 = vsub.f32 %v647, %v653
      %655 = vst [vmem:[%s355] sm:$0xff] %v654
      %656 = vst [vmem:[#allocation2] sm:$0xff] %v547
      %p657 = scmp.eq.s32.totalorder %s25, 7
      // Predicated region
      $region53: #{rnn_sequence_forward.1} parent=47 // pred_check
        %p658 = pneg %p657
      $region54: #{rnn_sequence_forward.1} parent=47 // pred_check_branch
        %660 = sbr.rel (%p658) target = $region56
      $region55: #{rnn_sequence_forward.1} parent=47 // pred_region
        %661 = vst [vmem:[%s359] sm:$0xff] %v547
      $region56: #{rnn_sequence_forward.1} parent=47 // pred_fallthru
        _
      %p662 = scmp.lt.s32.totalorder %s25, 7
      %s663 = scalar_select %p662, %s25, 7
      %p664 = scmp.lt.s32.totalorder %s24, 0
      %s665 = scalar_select %p664, %s24, 0
      %s666 = sadd.s32 %s665, %s663
      %s667 = smul.addr %s666, 8
      %s668 = scalar_lea.vmem %s7, %s667
      %p669 = scmp.lt.s32.totalorder %s24, 0
      %s670 = scalar_select %p669, %s24, 0
      %s671 = smul.addr %s670, 8
      %s672 = scalar_lea.vmem %s8, %s671
      // Predicated region
      $region57: #{rnn_sequence_forward.1} parent=47 // pred_check
        %p673 = pneg %p211
      $region58: #{rnn_sequence_forward.1} parent=47 // pred_check_branch
        %675 = sbr.rel (%p673) target = $region60
      $region59: #{rnn_sequence_forward.1} parent=47 // pred_region
        _
      $region60: #{rnn_sequence_forward.1} parent=47 // pred_fallthru
        _
      // Predicated region
      $region61: #{rnn_sequence_forward.1} parent=47 // pred_check
        %p676 = pneg %p237
      $region62: #{rnn_sequence_forward.1} parent=47 // pred_check_branch
        %678 = sbr.rel (%p676) target = $region64
      $region63: #{rnn_sequence_forward.1} parent=47 // pred_region
        _
      $region64: #{rnn_sequence_forward.1} parent=47 // pred_fallthru
        _
      // Predicated region
      $region65: #{rnn_sequence_forward.1} parent=47 // pred_check
        %p679 = pneg %p237
      $region66: #{rnn_sequence_forward.1} parent=47 // pred_check_branch
        %681 = sbr.rel (%p679) target = $region68
      $region67: #{rnn_sequence_forward.1} parent=47 // pred_region
        %p682 = scmp.lt.s32.totalorder %s24, 0
        %s683 = scalar_select %p682, %s24, 0
        %s684 = smul.addr %s683, 8
        %s685 = scalar_lea.vmem %s8, %s684
      $region68: #{rnn_sequence_forward.1} parent=47 // pred_fallthru
        _
    $region48: #{rnn_sequence_forward.1} parent=5 // pred_fallthru
      _
    %p686 = scmp.le.s32.totalorder 2, %s15
    // Predicated region
    $region69: #{rnn_sequence_forward.1} parent=5 // pred_check
      %p687 = pneg %p686
    $region70: #{rnn_sequence_forward.1} parent=5 // pred_check_branch
      %689 = sbr.rel (%p687) target = $region72
    $region71: #{rnn_sequence_forward.1} parent=5 // pred_region
      %s690 = ssub.s32 %s15, 2
      // Predicated region
      $region73: #{rnn_sequence_forward.1} parent=71 // pred_check
        %p691 = pneg %p217
      $region74: #{rnn_sequence_forward.1} parent=71 // pred_check_branch
        %693 = sbr.rel (%p691) target = $region76
      $region75: #{rnn_sequence_forward.1} parent=71 // pred_region
        %p694 = scmp.lt.s32.totalorder %s27, 7
        %s695 = scalar_select %p694, %s27, 7
        %p696 = scmp.lt.s32.totalorder %s26, 0
        %s697 = scalar_select %p696, %s26, 0
        %s698 = sadd.s32 %s697, %s695
        %s699 = smul.addr %s698, 8
        %s700 = scalar_lea.vmem %s7, %s699
      $region76: #{rnn_sequence_forward.1} parent=71 // pred_fallthru
        _
    $region72: #{rnn_sequence_forward.1} parent=5 // pred_fallthru
      _
  $region6: #{rnn_sequence_forward.1} parent=0 // loop_footer
    %s19 = sadd.s32 1, %s15
  $region7: #{rnn_sequence_forward.1} parent=0 // loop_footer_branch
    %14 = sbr.rel target = $region3
  $region8: #{rnn_sequence_forward.1} parent=0 // loop_exit
    _

</llo_original>
